<compile_context>
chip_gen: v5e
topology: v5e:2x2
jax: 0.10.0
libtpu: 0.0.40
codegen_flags: <defaults>
</compile_context>

<pallas_src>
import jax
import jax.numpy as jnp
from jax.experimental import pallas as pl
from jax.experimental.pallas import tpu as pltpu


def _round_up(x, m):
    return ((x + m - 1) // m) * m


def _choose_tiles(M, H, O):
    # Decode-like shapes (small M = B*S): keep the full M block resident and
    # tile only N/K so the weight matrix is read from HBM once.
    tm = _round_up(M, 8) if M <= 512 else 256
    tk = min(512, _round_up(H, 128))
    tn = min(256, _round_up(O, 128))
    return tm, tk, tn


def _linear_bias_kernel(x_ref, w_ref, b_ref, o_ref, acc_ref):
    # x_ref: (tm, tk) bf16, w_ref: (tk, tn) bf16, b_ref: (1, tn) f32,
    # o_ref: (tm, tn) out dtype, acc_ref: (tm, tn) f32 scratch.
    k = pl.program_id(2)

    # Fold bias into the accumulator init instead of a separate epilogue add.
    @pl.when(k == 0)
    def _():
        acc_ref[...] = jnp.broadcast_to(b_ref[...], acc_ref.shape)

    acc_ref[...] += jnp.dot(
        x_ref[...], w_ref[...], preferred_element_type=jnp.float32
    )

    @pl.when(k == pl.num_programs(2) - 1)
    def _():
        o_ref[...] = acc_ref[...].astype(o_ref.dtype)


def linear_pallas(x2d, weight, bias, *, out_dtype=jnp.float32):
    """x2d: (M, H); weight: (H, O); bias: (O,).  Returns (M, O)."""
    M, H = x2d.shape
    O = weight.shape[1]

    tm, tk, tn = _choose_tiles(M, H, O)
    M_pad = _round_up(M, tm)
    H_pad = _round_up(H, tk)
    O_pad = _round_up(O, tn)  # multiple of 128 -> lane-dense unmasked stores

    # Zero-pad (padded H columns of x are zero, so padded weight rows
    # contribute nothing); cast the matmul operands to bf16 for the MXU.
    x_p = jnp.pad(x2d, ((0, M_pad - M), (0, H_pad - H))).astype(jnp.bfloat16)
    w_p = jnp.pad(weight, ((0, H_pad - H), (0, O_pad - O))).astype(jnp.bfloat16)
    b_p = jnp.pad(bias, (0, O_pad - O)).astype(jnp.float32).reshape(1, O_pad)

    grid = (M_pad // tm, O_pad // tn, H_pad // tk)

    out = pl.pallas_call(
        _linear_bias_kernel,
        out_shape=jax.ShapeDtypeStruct((M_pad, O_pad), out_dtype),
        grid_spec=pltpu.PrefetchScalarGridSpec(
            num_scalar_prefetch=0,
            grid=grid,
            in_specs=[
                pl.BlockSpec((tm, tk), lambda i, j, k: (i, k)),
                pl.BlockSpec((tk, tn), lambda i, j, k: (k, j)),
                pl.BlockSpec((1, tn), lambda i, j, k: (0, j)),
            ],
            out_specs=pl.BlockSpec((tm, tn), lambda i, j, k: (i, j)),
            scratch_shapes=[pltpu.VMEM((tm, tn), jnp.float32)],
        ),
        compiler_params=pltpu.CompilerParams(
            dimension_semantics=("parallel", "parallel", "arbitrary"),
            vmem_limit_bytes=48 * 1024 * 1024,
        ),
    )(x_p, w_p, b_p)

    return out[:M, :O]


def single_mlp_output_forward(x, weight, bias):
    """Mirrors the PyTorch module: reads x['attn_data'], writes
    x['output_data'], returns the dict.  (Dropout is unused in forward.)"""
    attn = x["attn_data"]  # (B, S, H)
    B, S, H = attn.shape
    out2d = linear_pallas(attn.reshape(B * S, H), weight, bias)
    x["output_data"] = out2d.reshape(B, S, weight.shape[1])
    return x


def init_params(key, hidden_size, output_size):
    # PyTorch stores Linear weight as (out, in); we keep (in, out) so the
    # kernel computes x @ W == x @ weight.T in PyTorch terms.
    kw, kb = jax.random.split(key)
    bound = 1.0 / jnp.sqrt(hidden_size)
    weight = jax.random.uniform(
        kw, (hidden_size, output_size), jnp.float32, -bound, bound
    )
    bias = jax.random.uniform(kb, (output_size,), jnp.float32, -bound, bound)
    return weight, bias


if __name__ == "__main__":
    batch, seq, hidden_size, output_size = 2, 8, 32, 16

    key = jax.random.PRNGKey(0)
    k_x, k_p = jax.random.split(key)

    attn_data = jax.random.normal(k_x, (batch, seq, hidden_size), jnp.float32)
    weight, bias = init_params(k_p, hidden_size, output_size)

    x = {"attn_data": attn_data}
    x = single_mlp_output_forward(x, weight, bias)
    out = jax.block_until_ready(x["output_data"])
    assert out.shape == (batch, seq, output_size)

    # Reference 1: same-precision (bf16 operands, f32 accumulate) -> tight tol.
    ref_bf16 = (
        jnp.dot(
            attn_data.reshape(-1, hidden_size).astype(jnp.bfloat16),
            weight.astype(jnp.bfloat16),
            preferred_element_type=jnp.float32,
        ).reshape(batch, seq, output_size)
        + bias
    )
    assert jnp.allclose(out, ref_bf16, atol=1e-3, rtol=1e-3)

    # Reference 2: full-f32 PyTorch semantics -> loose tol (bf16 operand cast).
    ref_f32 = attn_data @ weight + bias
    assert jnp.allclose(out, ref_f32, atol=5e-2, rtol=5e-2)

    print("KERNEL_OK")
</pallas_src>

<mosaic_0001>
module attributes {stable_mosaic.version = 11 : i64} {
  func.func @_linear_bias_kernel(%arg0: i32, %arg1: i32, %arg2: i32, %arg3: memref<16x128xbf16, #tpu.memory_space<vmem>>, %arg4: memref<128x128xbf16, #tpu.memory_space<vmem>>, %arg5: memref<1x128xf32, #tpu.memory_space<vmem>>, %arg6: memref<16x128xf32, #tpu.memory_space<vmem>>, %arg7: memref<16x128xf32, #tpu.memory_space<vmem>>) attributes {dimension_semantics = [#tpu.dimension_semantics<parallel>, #tpu.dimension_semantics<parallel>, #tpu.dimension_semantics<arbitrary>], iteration_bounds = array<i64: 1, 1, 1>, scalar_prefetch = 0 : i64, scratch_operands = 1 : i64, tpu.core_type = #tpu.core_type<tc>, window_params = [{transform_indices = @transform_0, window_bounds = array<i64: 16, 128>}, {transform_indices = @transform_1, window_bounds = array<i64: 128, 128>}, {transform_indices = @transform_2, window_bounds = array<i64: 1, 128>}, {transform_indices = @transform_3, window_bounds = array<i64: 16, 128>}]} {
    %c0_i32 = arith.constant 0 : i32
    %0 = arith.cmpi eq, %arg2, %c0_i32 : i32
    %1 = arith.extui %0 : i1 to i32
    %c0_i32_0 = arith.constant 0 : i32
    %2 = arith.cmpi ne, %1, %c0_i32_0 : i32
    scf.if %2 {
      %c0_10 = arith.constant 0 : index
      %c0_11 = arith.constant 0 : index
      %12 = vector.load %arg5[%c0_10, %c0_11] : memref<1x128xf32, #tpu.memory_space<vmem>>, vector<1x128xf32>
      %13 = vector.shape_cast %12 : vector<1x128xf32> to vector<1x128xf32>
      %14 = vector.broadcast %13 : vector<1x128xf32> to vector<16x128xf32>
      %c0_12 = arith.constant 0 : index
      %c0_13 = arith.constant 0 : index
      %15 = vector.load %arg7[%c0_12, %c0_13] : memref<16x128xf32, #tpu.memory_space<vmem>>, vector<16x128xf32>
      tpu.vector_store %arg7[%c0_12, %c0_13], %14 {strides = array<i32>} : memref<16x128xf32, #tpu.memory_space<vmem>>, vector<16x128xf32>,
    } else {
    }
    %c0 = arith.constant 0 : index
    %c0_1 = arith.constant 0 : index
    %3 = vector.load %arg7[%c0, %c0_1] : memref<16x128xf32, #tpu.memory_space<vmem>>, vector<16x128xf32>
    %c0_2 = arith.constant 0 : index
    %c0_3 = arith.constant 0 : index
    %4 = vector.load %arg3[%c0_2, %c0_3] : memref<16x128xbf16, #tpu.memory_space<vmem>>, vector<16x128xbf16>
    %c0_4 = arith.constant 0 : index
    %c0_5 = arith.constant 0 : index
    %5 = vector.load %arg4[%c0_4, %c0_5] : memref<128x128xbf16, #tpu.memory_space<vmem>>, vector<128x128xbf16>
    %cst = arith.constant dense<0.000000e+00> : vector<16x128xf32>
    %6 = tpu.matmul %4, %5, %cst {dimension_numbers = #tpu.dot_dimension_numbers<[1], [0], [0], [1], [0, 0, 1, 1], [], []>} : vector<16x128xbf16>, vector<128x128xbf16>, vector<16x128xf32> -> vector<16x128xf32>
    %7 = arith.addf %3, %6 : vector<16x128xf32>
    %c0_6 = arith.constant 0 : index
    %c0_7 = arith.constant 0 : index
    %8 = vector.load %arg7[%c0_6, %c0_7] : memref<16x128xf32, #tpu.memory_space<vmem>>, vector<16x128xf32>
    tpu.vector_store %arg7[%c0_6, %c0_7], %7 {strides = array<i32>} : memref<16x128xf32, #tpu.memory_space<vmem>>, vector<16x128xf32>,
    %c0_i32_8 = arith.constant 0 : i32
    %9 = arith.cmpi eq, %arg2, %c0_i32_8 : i32
    %10 = arith.extui %9 : i1 to i32
    %c0_i32_9 = arith.constant 0 : i32
    %11 = arith.cmpi ne, %10, %c0_i32_9 : i32
    scf.if %11 {
      %c0_10 = arith.constant 0 : index
      %c0_11 = arith.constant 0 : index
      %12 = vector.load %arg7[%c0_10, %c0_11] : memref<16x128xf32, #tpu.memory_space<vmem>>, vector<16x128xf32>
      %c0_12 = arith.constant 0 : index
      %c0_13 = arith.constant 0 : index
      %13 = vector.load %arg6[%c0_12, %c0_13] : memref<16x128xf32, #tpu.memory_space<vmem>>, vector<16x128xf32>
      tpu.vector_store %arg6[%c0_12, %c0_13], %12 {strides = array<i32>} : memref<16x128xf32, #tpu.memory_space<vmem>>, vector<16x128xf32>,
    } else {
    }
    return
  }
  func.func @transform_0(%arg0: i32, %arg1: i32, %arg2: i32) -> (i32, i32) {
    %c0_i32 = arith.constant 0 : i32
    return %arg0, %arg2 : i32, i32
  }
  func.func @transform_1(%arg0: i32, %arg1: i32, %arg2: i32) -> (i32, i32) {
    %c0_i32 = arith.constant 0 : i32
    return %arg2, %arg1 : i32, i32
  }
  func.func @transform_2(%arg0: i32, %arg1: i32, %arg2: i32) -> (i32, i32) {
    %c0_i32 = arith.constant 0 : i32
    %c0_i32_0 = arith.constant 0 : i32
    return %c0_i32, %arg1 : i32, i32
  }
  func.func @transform_3(%arg0: i32, %arg1: i32, %arg2: i32) -> (i32, i32) {
    %c0_i32 = arith.constant 0 : i32
    return %arg0, %arg1 : i32, i32
  }
}

</mosaic_0001>

<llo_original>
// kernel: tpu_custom_call.1
$region0: #{tpu_custom_call.1}
  #allocation0 [shape = 'u32[]', space=smem, size = 0x4, offset = 0x4, fixed_abs, tag = 'smem constant byte address 0x4 - core index']
  #allocation1 [shape = 'u32[72,128]{1,0:T(1,128)}', space=vmem, size = 0x9000, scoped, tag = 'internal scratch']
  #allocation2 [shape = 'f32[16,128]{1,0:T(8,128)}', space=vmem, size = 0x2000, scoped, tag = 'scratch operand']
  %s0 = inlined_call_operand.hbm [shape: bf16[16,128], index: 0, kind: input, shape index: {}]
  %s1 = inlined_call_operand.hbm [shape: bf16[128,128], index: 1, kind: input, shape index: {}]
  %s2 = inlined_call_operand.vmem [shape: f32[1,128], index: 2, kind: input, shape index: {}]
  %s3 = inlined_call_operand.hbm [shape: f32[16,128], index: 3, kind: output, shape index: {}]
  %s4 = sld [smem:[#allocation0]]
  $region38: #{tpu_custom_call.1} parent=0
    _
  %s6 = ssub.s32 1, %s4
  %s7 = scalar_select 0, %s6, %s4
  $region1: #{tpu_custom_call.1} parent=0
    #allocation3 [shape = 'u8[4096]{0}', space=vmem, size = 0x1000, scoped, tag = 'input window, operand 0, single buffered']
    #allocation4 [shape = 's32[1]{0}', space=sflag, size = 0x4, scoped, tag = 'scoped memory for tpu_custom_call.1']
    #allocation5 [shape = 's32[1]{0}', space=sflag, size = 0x4, scoped, tag = 'scoped memory for tpu_custom_call.1']
    #allocation6 [shape = 'u8[32768]{0}', space=vmem, size = 0x8000, scoped, tag = 'input window, operand 1, single buffered']
    #allocation7 [shape = 's32[1]{0}', space=sflag, size = 0x4, scoped, tag = 'scoped memory for tpu_custom_call.1']
    #allocation8 [shape = 'u8[8192]{0}', space=vmem, size = 0x2000, scoped, tag = 'output window, operand 0, single buffered']
    %8 = vsyncpa [#allocation4], 0
    %9 = vsyncpa [#allocation7], 0
    %10 = vsyncpa [#allocation5], 0
    // Predicated region
    $region2: #{tpu_custom_call.1} parent=1 // pred_check
      _
    $region3: #{tpu_custom_call.1} parent=1 // pred_check_branch
      %12 = sbr.rel (0) target = $region5
    $region4: #{tpu_custom_call.1} parent=1 // pred_region
      %14 = vsyncadd [#allocation4], 0
      %s15 = sshll.u32 %s0, 4
      %s16 = int_to_ptr.hbm [resolvable:$true] %s15
      %s17 = sshll.u32 [#allocation3], 4
      %s18 = int_to_ptr.vmem [resolvable:$true] %s17
      %23 = dma.hbm_to_vmem [thread:$0]  %s16, 128, %s18, [#allocation4], 64, 64, 4
    $region5: #{tpu_custom_call.1} parent=1 // pred_fallthru
      _
    // Predicated region
    $region6: #{tpu_custom_call.1} parent=1 // pred_check
      _
    $region7: #{tpu_custom_call.1} parent=1 // pred_check_branch
      %25 = sbr.rel (0) target = $region9
    $region8: #{tpu_custom_call.1} parent=1 // pred_region
      %27 = vsyncadd [#allocation7], 0
      %s28 = sshll.u32 %s1, 4
      %s29 = int_to_ptr.hbm [resolvable:$true] %s28
      %s30 = sshll.u32 [#allocation6], 4
      %s31 = int_to_ptr.vmem [resolvable:$true] %s30
      %36 = dma.hbm_to_vmem [thread:$0]  %s29, 1024, %s31, [#allocation7], 64, 64, 4
    $region9: #{tpu_custom_call.1} parent=1 // pred_fallthru
      _
    // Predicated region
    $region10: #{tpu_custom_call.1} parent=1 // pred_check
      _
    $region11: #{tpu_custom_call.1} parent=1 // pred_check_branch
      %38 = sbr.rel (0) target = $region13
    $region12: #{tpu_custom_call.1} parent=1 // pred_region
      _
    $region13: #{tpu_custom_call.1} parent=1 // pred_fallthru
      _
    // Predicated region
    $region14: #{tpu_custom_call.1} parent=1 // pred_check
      _
    $region15: #{tpu_custom_call.1} parent=1 // pred_check_branch
      %40 = sbr.rel (0) target = $region17
    $region16: #{tpu_custom_call.1} parent=1 // pred_region
      %42 = dma.done [#allocation4], 128
    $region17: #{tpu_custom_call.1} parent=1 // pred_fallthru
      _
    // Predicated region
    $region18: #{tpu_custom_call.1} parent=1 // pred_check
      _
    $region19: #{tpu_custom_call.1} parent=1 // pred_check_branch
      %44 = sbr.rel (0) target = $region21
    $region20: #{tpu_custom_call.1} parent=1 // pred_region
      %46 = dma.done [#allocation7], 1024
    $region21: #{tpu_custom_call.1} parent=1 // pred_fallthru
      _
    %p47 = scmp.eq.s32.totalorder 0, 0
    // Predicated region
    $region22: #{tpu_custom_call.1} parent=1 // pred_check
      %p48 = pneg %p47
    $region23: #{tpu_custom_call.1} parent=1 // pred_check_branch
      %50 = sbr.rel (%p48) target = $region25
    $region24: #{tpu_custom_call.1} parent=1 // pred_region
      %v51 = vld [vmem:[%s2] sm:$0x1]
      %v53 = vperm.slane %v51, 0
      %55 = vst [vmem:[#allocation2] sm:$0xff] %v53
      %56 = vst [vmem:[#allocation2 + $0x8] sm:$0xff] %v53
    $region25: #{tpu_custom_call.1} parent=1 // pred_fallthru
      _
    %v57 = vld [vmem:[#allocation2] sm:$0xff]
    %v58 = vld [vmem:[#allocation2 + $0x8] sm:$0xff]
    %v59 = vld [vmem:[#allocation3] sm:$0xf]
    %v60 = vld [vmem:[#allocation3 + $0x4] sm:$0xf]
    %v61 = vld [vmem:[#allocation6] sm:$0xf]
    %v62 = vld [vmem:[#allocation6 + $0x4] sm:$0xf]
    %v63 = vld [vmem:[#allocation6 + $0x8] sm:$0xf]
    %v64 = vld [vmem:[#allocation6 + $0xc] sm:$0xf]
    %v65 = vld [vmem:[#allocation6 + $0x10] sm:$0xf]
    %v66 = vld [vmem:[#allocation6 + $0x14] sm:$0xf]
    %v67 = vld [vmem:[#allocation6 + $0x18] sm:$0xf]
    %v68 = vld [vmem:[#allocation6 + $0x1c] sm:$0xf]
    %v69 = vld [vmem:[#allocation6 + $0x20] sm:$0xf]
    %v70 = vld [vmem:[#allocation6 + $0x24] sm:$0xf]
    %v71 = vld [vmem:[#allocation6 + $0x28] sm:$0xf]
    %v72 = vld [vmem:[#allocation6 + $0x2c] sm:$0xf]
    %v73 = vld [vmem:[#allocation6 + $0x30] sm:$0xf]
    %v74 = vld [vmem:[#allocation6 + $0x34] sm:$0xf]
    %v75 = vld [vmem:[#allocation6 + $0x38] sm:$0xf]
    %v76 = vld [vmem:[#allocation6 + $0x3c] sm:$0xf]
    %v79 = vunpack.c.l.b16 %v59
    %v80 = vunpack.c.l.b16 %v60
    %v81 = vpack.c.b16 %v80, %v79
    %v99 = vunpack.c.l.b16 %v61
    %v100 = vunpack.c.l.b16 %v62
    %v101 = vunpack.c.l.b16 %v63
    %v102 = vunpack.c.l.b16 %v64
    %v103 = vunpack.c.l.b16 %v65
    %v104 = vunpack.c.l.b16 %v66
    %v105 = vunpack.c.l.b16 %v67
    %v106 = vunpack.c.l.b16 %v68
    %v107 = vunpack.c.l.b16 %v69
    %v108 = vunpack.c.l.b16 %v70
    %v109 = vunpack.c.l.b16 %v71
    %v110 = vunpack.c.l.b16 %v72
    %v111 = vunpack.c.l.b16 %v73
    %v112 = vunpack.c.l.b16 %v74
    %v113 = vunpack.c.l.b16 %v75
    %v114 = vunpack.c.l.b16 %v76
    %v115 = vpack.c.b16 %v100, %v99
    %v116 = vpack.c.b16 %v102, %v101
    %v117 = vpack.c.b16 %v104, %v103
    %v118 = vpack.c.b16 %v106, %v105
    %v119 = vpack.c.b16 %v108, %v107
    %v120 = vpack.c.b16 %v110, %v109
    %v121 = vpack.c.b16 %v112, %v111
    %v122 = vpack.c.b16 %v114, %v113
    %131 = vmatpush.bf16.msra.mxu0 %v122
    %132 = vmatpush.bf16.msra.mxu0 %v121
    %133 = vmatpush.bf16.msra.mxu0 %v120
    %134 = vmatpush.bf16.msra.mxu0 %v119
    %135 = vmatpush.bf16.msra.mxu0 %v118
    %136 = vmatpush.bf16.msra.mxu0 %v117
    %137 = vmatpush.bf16.msra.mxu0 %v116
    %138 = vmatpush.bf16.msra.mxu0 %v115
    %139 = vmatmul.bf16.gmra.mxu0 %v81
    %v140 = vpop.f32.mrf.mxu0
    %v141 = vadd.f32 0.0, %v140
    %v142 = vpop.f32.mrf.mxu0
    %v143 = vadd.f32 0.0, %v142
    %144 = vdwg.mxu0
    %v145 = vadd.f32 %v57, %v141
    %v146 = vadd.f32 %v58, %v143
    %147 = vst [vmem:[#allocation2] sm:$0xff] %v145
    %148 = vst [vmem:[#allocation2 + $0x8] sm:$0xff] %v146
    // Predicated region
    $region26: #{tpu_custom_call.1} parent=1 // pred_check
      %p149 = pneg %p47
    $region27: #{tpu_custom_call.1} parent=1 // pred_check_branch
      %151 = sbr.rel (%p149) target = $region29
    $region28: #{tpu_custom_call.1} parent=1 // pred_region
      %v152 = vld [vmem:[#allocation2] sm:$0xff]
      %v153 = vld [vmem:[#allocation2 + $0x8] sm:$0xff]
      %154 = vst [vmem:[#allocation8] sm:$0xff] %v152
      %155 = vst [vmem:[#allocation8 + $0x8] sm:$0xff] %v153
    $region29: #{tpu_custom_call.1} parent=1 // pred_fallthru
      _
    // Predicated region
    $region30: #{tpu_custom_call.1} parent=1 // pred_check
      _
    $region31: #{tpu_custom_call.1} parent=1 // pred_check_branch
      %157 = sbr.rel (0) target = $region33
    $region32: #{tpu_custom_call.1} parent=1 // pred_region
      %159 = vsyncadd [#allocation5], 0
      %s160 = sshll.u32 [#allocation8], 4
      %s161 = int_to_ptr.vmem [resolvable:$true] %s160
      %s162 = sshll.u32 %s3, 4
      %s163 = int_to_ptr.hbm [resolvable:$true] %s162
      %168 = dma.vmem_to_hbm [thread:$0]  %s161, 256, %s163, [#allocation5], 128, 128, 8
    $region33: #{tpu_custom_call.1} parent=1 // pred_fallthru
      _
    // Predicated region
    $region34: #{tpu_custom_call.1} parent=1 // pred_check
      _
    $region35: #{tpu_custom_call.1} parent=1 // pred_check_branch
      %170 = sbr.rel (0) target = $region37
    $region36: #{tpu_custom_call.1} parent=1 // pred_region
      %172 = dma.done [#allocation5], 256
    $region37: #{tpu_custom_call.1} parent=1 // pred_fallthru
      _
    %173 = vsyncpa [#allocation4], 1
    %174 = vsyncpa [#allocation7], 1
    %175 = vsyncpa [#allocation5], 1

</llo_original>
